<compile_context>
chip_gen: v7x
topology: tpu7x:2x2x1
jax: 0.10.0
libtpu: 0.0.40
codegen_flags: <defaults>
</compile_context>

<pallas_src>
import functools

import jax
import jax.numpy as jnp
import numpy as np
from jax.experimental import pallas as pl
from jax.experimental.pallas import tpu as pltpu


def _cdiv(a, b):
    return (a + b - 1) // b


def _joints_mse_kernel(pred_ref, gt_ref, vis_ref, out_ref, *,
                       tile_r, chunk_r, total_rows, needs_mask):
    """One grid step processes one (tile_r, HW) row-chunk of the flattened tensors.

    pred_ref / gt_ref : (tile_r, HW) VMEM tiles (native dtype)
    vis_ref           : (tile_r, 1)  VMEM tile (per-row visibility)
    out_ref           : (out_rows, HW) f32 partial sum for this grid step
    """
    hw = pred_ref.shape[-1]
    out_rows = out_ref.shape[0]
    num_chunks = tile_r // chunk_r

    def chunk_partial(c):
        # Row offset of this chunk inside the tile (static in the 1-chunk case).
        if isinstance(c, int):
            start = c * chunk_r
        else:
            start = pl.multiple_of(c * chunk_r, chunk_r)
        p = pred_ref[pl.ds(start, chunk_r), :].astype(jnp.float32)
        g = gt_ref[pl.ds(start, chunk_r), :].astype(jnp.float32)
        v = vis_ref[pl.ds(start, chunk_r), :].astype(jnp.float32)  # (chunk_r,1) broadcasts
        d = (p - g) * v                                            # == vis*pred - vis*gt
        sq = d * d                                                 # (chunk_r, HW) f32
        if needs_mask:
            # Rows >= total_rows on the last grid tile hold unspecified data;
            # zero them with a cheap VPU select (select discards NaN/Inf).
            row0 = pl.program_id(0) * tile_r + start
            row_ids = row0 + jax.lax.broadcasted_iota(jnp.int32, (chunk_r, 1), 0)
            sq = jnp.where(row_ids < total_rows, sq, 0.0)
        if chunk_r > out_rows:
            # (chunk_r, HW) -> (chunk_r//8, 8, HW) is layout preserving, so the
            # sum over axis 0 lowers to plain VPU adds (no XLU on the hot path).
            sq = jnp.sum(sq.reshape(chunk_r // out_rows, out_rows, hw), axis=0)
        return sq

    if num_chunks == 1:
        out_ref[...] = chunk_partial(0)
    else:
        acc0 = chunk_partial(0)
        acc = jax.lax.fori_loop(
            1, num_chunks, lambda c, acc: acc + chunk_partial(c), acc0,
            unroll=(num_chunks <= 8))
        out_ref[...] = acc


def joints_mse_loss(output, target, keypoint_visibility):
    """output, target: (B, J, H, W); keypoint_visibility: (B, J). Returns scalar f32."""
    B, J = int(output.shape[0]), int(output.shape[1])
    HW = int(np.prod(output.shape[2:]))
    R = B * J

    # Free reshapes of contiguous trailing dims (no transpose, no pad, no cast).
    pred2 = output.reshape(R, HW)
    gt2 = target.reshape(R, HW)
    vis2 = keypoint_visibility.reshape(R, 1)

    itemsize = jnp.dtype(output.dtype).itemsize
    row_bytes_in = HW * itemsize
    row_bytes_f32 = HW * 4

    if R < 8:
        # Degenerate tiny problem: single block equal to the full array dims
        # (legal even when R % 8 != 0).
        tile_r = chunk_r = out_rows = R
    else:
        out_rows = 8
        # Inner-loop chunk: bound live f32 intermediates to ~512 KiB per array.
        chunk_r = (512 * 1024) // max(row_bytes_f32, 1)
        chunk_r = max(8, min(chunk_r // 8 * 8, (R // 8) * 8))
        # Input tile: ~4 MiB per operand per grid step. 2 operands x 2 pipeline
        # buffers ~= 16 MiB of VMEM, well under the explicit 48 MiB limit.
        tile_r = (4 * 1024 * 1024) // max(row_bytes_in, 1)
        tile_r = max(chunk_r, (tile_r // chunk_r) * chunk_r)
        # Guarantee >= 2 grid steps when possible so both v7x TensorCores get
        # work; the cap never exceeds R, so block shapes stay legal.
        half_cap = _cdiv(_cdiv(R, 2), chunk_r) * chunk_r
        tile_r = min(tile_r, half_cap)

    num_tiles = _cdiv(R, tile_r)
    needs_mask = (R % tile_r) != 0  # mask against the TRUE row count (no pad)

    # 0.5 * mean over (B*HW) per joint, averaged over J joints.
    scale = np.float32(0.5 / (J * B * HW))

    kernel = functools.partial(
        _joints_mse_kernel,
        tile_r=tile_r,
        chunk_r=chunk_r,
        total_rows=R,
        needs_mask=needs_mask,
    )

    partials = pl.pallas_call(
        kernel,
        out_shape=jax.ShapeDtypeStruct((num_tiles * out_rows, HW), jnp.float32),
        grid_spec=pltpu.PrefetchScalarGridSpec(
            num_scalar_prefetch=0,
            grid=(num_tiles,),
            in_specs=[
                pl.BlockSpec((tile_r, HW), lambda i: (i, 0)),
                pl.BlockSpec((tile_r, HW), lambda i: (i, 0)),
                pl.BlockSpec((tile_r, 1), lambda i: (i, 0)),
            ],
            out_specs=pl.BlockSpec((out_rows, HW), lambda i: (i, 0)),
        ),
        compiler_params=pltpu.CompilerParams(
            # Each grid step owns its output block -> fully parallel grid
            # (megacore-sharded across both TensorCores on v7x).
            dimension_semantics=("parallel",),
            # Explicit limit: double-buffered 4 MiB input tiles + chunked f32
            # intermediates stay far below this; fits v7x's 64 MiB physical VMEM.
            vmem_limit_bytes=48 * 1024 * 1024,
        ),
    )(pred2, gt2, vis2)

    # Cheap final reduction + scale on the tiny partial-sum array.
    return jnp.sum(partials) * scale


def _reference_loss(output, target, keypoint_visibility):
    """Pure-JAX mirror of the PyTorch forward for verification."""
    B, J = output.shape[0], output.shape[1]
    hp = output.reshape(B, J, -1).astype(jnp.float32)
    hg = target.reshape(B, J, -1).astype(jnp.float32)
    vis = keypoint_visibility.astype(jnp.float32)[..., None]  # (B, J, 1)
    loss = 0.0
    for idx in range(J):
        vp = hp[:, idx] * vis[:, idx]
        vg = hg[:, idx] * vis[:, idx]
        loss = loss + 0.5 * jnp.mean((vp - vg) ** 2)
    return loss / J


if __name__ == "__main__":
    key = jax.random.PRNGKey(0)

    # Case 1: canonical small shape (B*J multiple of 8, single tile).
    k1, k2, k3, key = jax.random.split(key, 4)
    B, J, H, W = 2, 4, 16, 16
    output = jax.random.normal(k1, (B, J, H, W), dtype=jnp.float32)
    target = jax.random.normal(k2, (B, J, H, W), dtype=jnp.float32)
    vis = (jax.random.uniform(k3, (B, J)) > 0.3).astype(jnp.float32)
    loss = jax.block_until_ready(joints_mse_loss(output, target, vis))
    ref = jax.block_until_ready(_reference_loss(output, target, vis))
    np.testing.assert_allclose(np.asarray(loss), np.asarray(ref), rtol=1e-5, atol=1e-6)

    # Case 2: B*J not a multiple of 8 -> exercises the unpadded masked tail and
    # the multi-tile (parallel-grid) path.
    k1, k2, k3, key = jax.random.split(key, 4)
    B, J, H, W = 3, 5, 16, 12
    output = jax.random.normal(k1, (B, J, H, W), dtype=jnp.float32)
    target = jax.random.normal(k2, (B, J, H, W), dtype=jnp.float32)
    vis = (jax.random.uniform(k3, (B, J)) > 0.3).astype(jnp.float32)
    loss = jax.block_until_ready(joints_mse_loss(output, target, vis))
    ref = jax.block_until_ready(_reference_loss(output, target, vis))
    np.testing.assert_allclose(np.asarray(loss), np.asarray(ref), rtol=1e-5, atol=1e-6)

    print("KERNEL_OK")
</pallas_src>

<mosaic_0001>
module attributes {stable_mosaic.version = 11 : i64} {
  func.func @_joints_mse_kernel(%arg0: i32, %arg1: memref<8x256xf32, #tpu.memory_space<vmem>>, %arg2: memref<8x256xf32, #tpu.memory_space<vmem>>, %arg3: memref<8x1xf32, #tpu.memory_space<vmem>>, %arg4: memref<8x256xf32, #tpu.memory_space<vmem>>) attributes {dimension_semantics = [#tpu.dimension_semantics<parallel>], iteration_bounds = array<i64: 1>, scalar_prefetch = 0 : i64, scratch_operands = 0 : i64, tpu.core_type = #tpu.core_type<tc>, window_params = [{transform_indices = @transform_0, window_bounds = array<i64: 8, 256>}, {transform_indices = @transform_1, window_bounds = array<i64: 8, 256>}, {transform_indices = @transform_2, window_bounds = array<i64: 8, 1>}, {transform_indices = @transform_3, window_bounds = array<i64: 8, 256>}]} {
    %c0 = arith.constant 0 : index
    %c0_0 = arith.constant 0 : index
    %0 = vector.load %arg1[%c0, %c0_0] : memref<8x256xf32, #tpu.memory_space<vmem>>, vector<8x256xf32>
    %c0_1 = arith.constant 0 : index
    %c0_2 = arith.constant 0 : index
    %1 = vector.load %arg2[%c0_1, %c0_2] : memref<8x256xf32, #tpu.memory_space<vmem>>, vector<8x256xf32>
    %c0_3 = arith.constant 0 : index
    %c0_4 = arith.constant 0 : index
    %2 = vector.load %arg3[%c0_3, %c0_4] : memref<8x1xf32, #tpu.memory_space<vmem>>, vector<8x1xf32>
    %3 = arith.subf %0, %1 : vector<8x256xf32>
    %4 = vector.broadcast %2 : vector<8x1xf32> to vector<8x256xf32>
    %5 = arith.mulf %3, %4 : vector<8x256xf32>
    %6 = arith.mulf %5, %5 : vector<8x256xf32>
    %c0_5 = arith.constant 0 : index
    %c0_6 = arith.constant 0 : index
    %7 = vector.load %arg4[%c0_5, %c0_6] : memref<8x256xf32, #tpu.memory_space<vmem>>, vector<8x256xf32>
    tpu.vector_store %arg4[%c0_5, %c0_6], %6 {strides = array<i32>} : memref<8x256xf32, #tpu.memory_space<vmem>>, vector<8x256xf32>,
    return
  }
  func.func @transform_0(%arg0: i32) -> (i32, i32) {
    %c0_i32 = arith.constant 0 : i32
    %c0_i32_0 = arith.constant 0 : i32
    return %arg0, %c0_i32 : i32, i32
  }
  func.func @transform_1(%arg0: i32) -> (i32, i32) {
    %c0_i32 = arith.constant 0 : i32
    %c0_i32_0 = arith.constant 0 : i32
    return %arg0, %c0_i32 : i32, i32
  }
  func.func @transform_2(%arg0: i32) -> (i32, i32) {
    %c0_i32 = arith.constant 0 : i32
    %c0_i32_0 = arith.constant 0 : i32
    return %arg0, %c0_i32 : i32, i32
  }
  func.func @transform_3(%arg0: i32) -> (i32, i32) {
    %c0_i32 = arith.constant 0 : i32
    %c0_i32_0 = arith.constant 0 : i32
    return %arg0, %c0_i32 : i32, i32
  }
}

</mosaic_0001>

<llo_original>
// kernel: tpu_custom_call.1
$region0: #{tpu_custom_call.1}
  #allocation0 [shape = 'u32[]', space=smem, size = 0x4, offset = 0x4, fixed_abs, tag = 'smem constant byte address 0x4 - core index']
  #allocation1 [shape = 'u32[144,128]{1,0:T(1,128)}', space=vmem, size = 0x12000, scoped, tag = 'internal scratch']
  %s0 = inlined_call_operand.hbm [shape: f32[8,256], index: 0, kind: input, shape index: {}]
  %s1 = inlined_call_operand.hbm [shape: f32[8,256], index: 1, kind: input, shape index: {}]
  %s2 = inlined_call_operand.vmem [shape: f32[8,1], index: 2, kind: input, shape index: {}]
  %s3 = inlined_call_operand.hbm [shape: f32[8,256], index: 3, kind: output, shape index: {}]
  %s4 = sld [smem:[#allocation0]]
  $region30: #{tpu_custom_call.1} parent=0
    _
  %s6 = ssub.s32 1, %s4
  %s7 = scalar_select 0, %s6, %s4
  $region1: #{tpu_custom_call.1} parent=0
    #allocation2 [shape = 'u8[8192]{0}', space=vmem, size = 0x2000, scoped, tag = 'input window, operand 0, single buffered']
    #allocation3 [shape = 's32[1]{0}', space=sflag, size = 0x4, scoped, tag = 'scoped memory for tpu_custom_call.1']
    #allocation4 [shape = 's32[1]{0}', space=sflag, size = 0x4, scoped, tag = 'scoped memory for tpu_custom_call.1']
    #allocation5 [shape = 'u8[8192]{0}', space=vmem, size = 0x2000, scoped, tag = 'input window, operand 1, single buffered']
    #allocation6 [shape = 's32[1]{0}', space=sflag, size = 0x4, scoped, tag = 'scoped memory for tpu_custom_call.1']
    #allocation7 [shape = 'u8[8192]{0}', space=vmem, size = 0x2000, scoped, tag = 'output window, operand 0, single buffered']
    %8 = vsyncpa [#allocation3], 0
    %9 = vsyncpa [#allocation6], 0
    %10 = vsyncpa [#allocation4], 0
    // Predicated region
    $region2: #{tpu_custom_call.1} parent=1 // pred_check
      _
    $region3: #{tpu_custom_call.1} parent=1 // pred_check_branch
      %12 = sbr.rel (0) target = $region5
    $region4: #{tpu_custom_call.1} parent=1 // pred_region
      %s14 = ssub.s32 256, 256
      %15 = vsyncadd [#allocation3], %s14
      %s17 = sshll.u32 [#allocation2], 4
      %s18 = int_to_ptr.vmem [resolvable:$true] %s17
      %20 = dma.hbm_to_vmem [thread:$0]  %s0, 256, %s18, [#allocation3]
    $region5: #{tpu_custom_call.1} parent=1 // pred_fallthru
      _
    // Predicated region
    $region6: #{tpu_custom_call.1} parent=1 // pred_check
      _
    $region7: #{tpu_custom_call.1} parent=1 // pred_check_branch
      %22 = sbr.rel (0) target = $region9
    $region8: #{tpu_custom_call.1} parent=1 // pred_region
      %s24 = ssub.s32 256, 256
      %25 = vsyncadd [#allocation6], %s24
      %s27 = sshll.u32 [#allocation5], 4
      %s28 = int_to_ptr.vmem [resolvable:$true] %s27
      %30 = dma.hbm_to_vmem [thread:$0]  %s1, 256, %s28, [#allocation6]
    $region9: #{tpu_custom_call.1} parent=1 // pred_fallthru
      _
    // Predicated region
    $region10: #{tpu_custom_call.1} parent=1 // pred_check
      _
    $region11: #{tpu_custom_call.1} parent=1 // pred_check_branch
      %32 = sbr.rel (0) target = $region13
    $region12: #{tpu_custom_call.1} parent=1 // pred_region
      _
    $region13: #{tpu_custom_call.1} parent=1 // pred_fallthru
      _
    // Predicated region
    $region14: #{tpu_custom_call.1} parent=1 // pred_check
      _
    $region15: #{tpu_custom_call.1} parent=1 // pred_check_branch
      %34 = sbr.rel (0) target = $region17
    $region16: #{tpu_custom_call.1} parent=1 // pred_region
      %35 = dma.done [#allocation3], 256
    $region17: #{tpu_custom_call.1} parent=1 // pred_fallthru
      _
    // Predicated region
    $region18: #{tpu_custom_call.1} parent=1 // pred_check
      _
    $region19: #{tpu_custom_call.1} parent=1 // pred_check_branch
      %37 = sbr.rel (0) target = $region21
    $region20: #{tpu_custom_call.1} parent=1 // pred_region
      %38 = dma.done [#allocation6], 256
    $region21: #{tpu_custom_call.1} parent=1 // pred_fallthru
      _
    %v39 = vld [vmem:[#allocation2] sm:$0xff]
    %v40 = vld [vmem:[#allocation2 + $0x8] sm:$0xff]
    %v41 = vld [vmem:[#allocation5] sm:$0xff]
    %v42 = vld [vmem:[#allocation5 + $0x8] sm:$0xff]
    %v43 = vld [vmem:[%s2] sm:$0xff]
    %v44 = vsub.f32 %v39, %v41
    %v45 = vsub.f32 %v40, %v42
    %47 = vset.pattern.permute.xlu0 0
    %48 = vperm.xlu0 %47, %v43
    %v49 = vpop.permute.xlu0 %48
    %v51 = vmul.f32 %v44, %v49
    %v52 = vmul.f32 %v45, %v49
    %v53 = vmul.f32 %v51, %v51
    %v54 = vmul.f32 %v52, %v52
    %55 = vst [vmem:[#allocation7] sm:$0xff] %v53
    %56 = vst [vmem:[#allocation7 + $0x8] sm:$0xff] %v54
    // Predicated region
    $region22: #{tpu_custom_call.1} parent=1 // pred_check
      _
    $region23: #{tpu_custom_call.1} parent=1 // pred_check_branch
      %58 = sbr.rel (0) target = $region25
    $region24: #{tpu_custom_call.1} parent=1 // pred_region
      %s60 = ssub.s32 256, 256
      %61 = vsyncadd [#allocation4], %s60
      %s63 = sshll.u32 [#allocation7], 4
      %s64 = int_to_ptr.vmem [resolvable:$true] %s63
      %66 = dma.vmem_to_hbm [thread:$0]  %s64, 256, %s3, [#allocation4]
    $region25: #{tpu_custom_call.1} parent=1 // pred_fallthru
      _
    // Predicated region
    $region26: #{tpu_custom_call.1} parent=1 // pred_check
      _
    $region27: #{tpu_custom_call.1} parent=1 // pred_check_branch
      %68 = sbr.rel (0) target = $region29
    $region28: #{tpu_custom_call.1} parent=1 // pred_region
      %69 = dma.done [#allocation4], 256
    $region29: #{tpu_custom_call.1} parent=1 // pred_fallthru
      _
    %70 = vsyncpa [#allocation3], 1
    %71 = vsyncpa [#allocation6], 1
    %72 = vsyncpa [#allocation4], 1

</llo_original>
